<compile_context>
chip_gen: v5e
topology: v5e:2x2
jax: 0.10.0
libtpu: 0.0.40
codegen_flags: <defaults>
</compile_context>

<pallas_src>
import functools

import jax
import jax.numpy as jnp
from jax.experimental import pallas as pl
from jax.experimental.pallas import tpu as pltpu

TEMPERATURE = 0.1


def _round_up(x, m):
    return (x + m - 1) // m * m


def _pick_config(B, K, D, in_itemsize, mm_itemsize, b_tile, k_tile):
    """Generation-aware tile sizes bounded by an explicit VMEM budget."""
    kind = ""
    try:
        kind = jax.devices()[0].device_kind.lower()
    except Exception:
        pass
    if "v5" in kind:
        # v5e: ~0.82 TB/s HBM vs 197 TF/s MXU -> b_tile ~256 crosses the
        # roofline; k_tile multiple of 128 matches the 4x128^2 MXU.
        target_b, k_pref, budget = 256, 256, 80 << 20
    elif "v6" in kind:
        # v6e: widest MXU/HBM gap (918 TF/s vs ~1.4 TB/s) and 128 MiB VMEM.
        target_b, k_pref, budget = 1024, 512, 96 << 20
    else:
        # v7x (64 MiB VMEM per TC) or unknown generation: be conservative.
        target_b, k_pref, budget = 512, 512, 40 << 20

    auto_b = b_tile is None
    auto_k = k_tile is None
    if auto_b:
        b_tile = min(target_b, _round_up(B, 8))
    if auto_k:
        k_tile = min(k_pref, _round_up(K, 128))

    def footprint(bt, kt):
        io = 2 * 2 * bt * D * in_itemsize        # q + pos, double-buffered
        io += 2 * kt * D * mm_itemsize           # neg tile, double-buffered
        scratch = bt * D * mm_itemsize + 3 * bt * 4
        temps = 3 * bt * kt * 4                  # s_neg / exp f32 temporaries
        return io + scratch + temps

    while auto_k and k_tile > 128 and footprint(b_tile, k_tile) > budget:
        k_tile = max(128, k_tile // 2)
    while auto_b and b_tile > 128 and footprint(b_tile, k_tile) > budget:
        b_tile = max(128, (b_tile // 2 + 7) // 8 * 8)

    vmem_limit = int(min(budget + (16 << 20), 112 << 20))
    return b_tile, k_tile, vmem_limit


def _nce_kernel(q_ref, pos_ref, neg_ref, out_ref,
                qs_sc, spos_sc, m_sc, l_sc,
                *, true_b, true_k, b_pad, k_pad, b_tile, k_tile):
    b_idx = pl.program_id(0)
    k_idx = pl.program_id(1)
    nk = pl.num_programs(1)

    inv_tau = jnp.float32(1.0 / TEMPERATURE)

    @pl.when(k_idx == 0)
    def _init():
        # Fold 1/tau into q once per B tile; cache in the MXU operand dtype.
        q_f32 = q_ref[...].astype(jnp.float32) * inv_tau
        qs_sc[...] = q_f32.astype(qs_sc.dtype)
        # Positive scores, computed once per B tile on the full-f32 path.
        s_pos = jnp.sum(q_f32 * pos_ref[...].astype(jnp.float32),
                        axis=-1, keepdims=True)              # (b_tile, 1)
        spos_sc[...] = s_pos
        # Seed the running logsumexp state with the positive logit.
        m_sc[...] = s_pos
        l_sc[...] = jnp.ones_like(l_sc)                      # exp(s_pos - s_pos)

    # Negative scores for this K tile: contract last dims -> no transpose.
    s_neg = jax.lax.dot_general(
        qs_sc[...], neg_ref[...],
        dimension_numbers=(((1,), (1,)), ((), ())),
        preferred_element_type=jnp.float32)                  # (b_tile, k_tile)

    def lse_update(s):
        # Online (streaming) logsumexp update.
        # TODO(synk): if bundle dumps ever show the XLU as the binding slot
        #             (tiny D), move the row-sum of exp() onto the MXU via a
        #             ones((k_tile, 1)) matvec.
        m_old = m_sc[...]
        m_new = jnp.maximum(m_old, jnp.max(s, axis=-1, keepdims=True))
        l_sc[...] = (jnp.exp(m_old - m_new) * l_sc[...]
                     + jnp.sum(jnp.exp(s - m_new), axis=-1, keepdims=True))
        m_sc[...] = m_new

    if k_pad > true_k:
        # Padded K columns live only in the LAST K tile; mask only there so
        # every steady-state step keeps the cheap unmasked update.
        @pl.when(k_idx < nk - 1)
        def _steady():
            lse_update(s_neg)

        @pl.when(k_idx == nk - 1)
        def _last():
            col = (jax.lax.broadcasted_iota(jnp.int32, s_neg.shape, 1)
                   + k_idx * k_tile)
            lse_update(jnp.where(col < true_k, s_neg, -jnp.inf))
    else:
        lse_update(s_neg)

    @pl.when(k_idx == nk - 1)
    def _finalize():
        lse = m_sc[...] + jnp.log(l_sc[...])
        per_sample = lse - spos_sc[...]                      # (b_tile, 1)
        if b_pad > true_b:  # static: mask padded batch rows out of the sum
            row = (jax.lax.broadcasted_iota(jnp.int32, per_sample.shape, 0)
                   + b_idx * b_tile)
            per_sample = jnp.where(row < true_b, per_sample, 0.0)
        partial = jnp.sum(per_sample, axis=0, keepdims=True)  # (1, 1)
        # Lane-dense write, once per B tile (last K step only).
        out_ref[0] = jnp.broadcast_to(partial, (8, 128))


def nce_loss(q, pos, neg, *, b_tile=None, k_tile=None, matmul_dtype=None,
             neg_buffers=2):
    """q: (B, D), pos: (B, D), neg: (K, D) -> scalar f32 InfoNCE loss."""
    B, D = q.shape
    K, Dn = neg.shape
    assert Dn == D and pos.shape == (B, D)

    in_dtype = jnp.dtype(q.dtype)
    if matmul_dtype is None:
        # The MXU is bf16-native on v5e/v6e/v7x; an f32 matmul takes a slower
        # multi-pass path.  Scores / LSE state remain f32 regardless.
        matmul_dtype = in_dtype if in_dtype.itemsize <= 2 else jnp.bfloat16
    matmul_dtype = jnp.dtype(matmul_dtype)

    b_tile, k_tile, vmem_limit = _pick_config(
        B, K, D, in_dtype.itemsize, matmul_dtype.itemsize, b_tile, k_tile)

    b_pad = _round_up(B, b_tile)
    k_pad = _round_up(K, k_tile)

    if neg.dtype != matmul_dtype:
        # Cast once in the wrapper: feeds the MXU directly and (for f32
        # inputs) halves the HBM bytes for the nb re-streams of the pool.
        neg = neg.astype(matmul_dtype)
    if b_pad != B:
        q = jnp.pad(q, ((0, b_pad - B), (0, 0)))
        pos = jnp.pad(pos, ((0, b_pad - B), (0, 0)))
    if k_pad != K:
        neg = jnp.pad(neg, ((0, k_pad - K), (0, 0)))

    nb = b_pad // b_tile
    nk = k_pad // k_tile

    kernel = functools.partial(
        _nce_kernel, true_b=B, true_k=K, b_pad=b_pad, k_pad=k_pad,
        b_tile=b_tile, k_tile=k_tile)

    cost = pl.CostEstimate(
        flops=2 * b_pad * k_pad * D + 2 * b_pad * D,
        transcendentals=b_pad * (k_pad + nk + 1),
        bytes_accessed=(2 * b_pad * D * in_dtype.itemsize
                        + nb * k_pad * D * matmul_dtype.itemsize
                        + nb * 8 * 128 * 4),
    )

    # Deeper prefetch on the streamed neg tiles only if requested (useful when
    # D is small and xprof shows exposed DMA); default 2 == BlockSpec default.
    neg_kwargs = {}
    if neg_buffers and neg_buffers != 2:
        neg_kwargs["pipeline_mode"] = pl.Buffered(neg_buffers)
    neg_spec = pl.BlockSpec((k_tile, D), lambda b, k: (k, 0), **neg_kwargs)

    partials = pl.pallas_call(
        kernel,
        out_shape=jax.ShapeDtypeStruct((nb, 8, 128), jnp.float32),
        grid_spec=pltpu.PrefetchScalarGridSpec(
            num_scalar_prefetch=0,
            grid=(nb, nk),
            in_specs=[
                pl.BlockSpec((b_tile, D), lambda b, k: (b, 0)),   # q
                pl.BlockSpec((b_tile, D), lambda b, k: (b, 0)),   # pos
                neg_spec,                                         # neg tile
            ],
            out_specs=pl.BlockSpec((1, 8, 128), lambda b, k: (b, 0, 0)),
            scratch_shapes=[
                pltpu.VMEM((b_tile, D), matmul_dtype),   # q * (1/tau) cache
                pltpu.VMEM((b_tile, 1), jnp.float32),    # s_pos cache
                pltpu.VMEM((b_tile, 1), jnp.float32),    # running max
                pltpu.VMEM((b_tile, 1), jnp.float32),    # running sum of exp
            ],
        ),
        # v7x megacore note: 'parallel' on the B axis only helps when nb > 1;
        # memory-bound shapes prefer nb == 1 with the largest feasible b_tile.
        compiler_params=pltpu.CompilerParams(
            dimension_semantics=("parallel", "arbitrary"),
            vmem_limit_bytes=vmem_limit,
        ),
        cost_estimate=cost,
    )(q, pos, neg)

    return jnp.sum(partials[:, 0, 0]) / jnp.float32(B)


def nce_loss_ref(q, pos, neg):
    """Pure-JAX reference for verification."""
    q = q.astype(jnp.float32)
    pos = pos.astype(jnp.float32)
    neg = neg.astype(jnp.float32)
    s_pos = jnp.sum(q * pos, axis=-1, keepdims=True) / TEMPERATURE
    s_neg = (q @ neg.T) / TEMPERATURE
    logits = jnp.concatenate([s_pos, s_neg], axis=-1)
    lse = jax.nn.logsumexp(logits, axis=-1, keepdims=True)
    return jnp.mean(lse - s_pos)


if __name__ == "__main__":
    # Case 1: tiny single-tile problem, exact f32 MXU path (tight tolerance).
    B, D, K = 8, 32, 16
    kq, kp, kn = jax.random.split(jax.random.PRNGKey(0), 3)
    q = jax.random.normal(kq, (B, D), dtype=jnp.float32)
    pos = jax.random.normal(kp, (B, D), dtype=jnp.float32)
    neg = jax.random.normal(kn, (K, D), dtype=jnp.float32)
    loss = jax.block_until_ready(nce_loss(q, pos, neg, matmul_dtype=jnp.float32))
    ref = jax.block_until_ready(nce_loss_ref(q, pos, neg))
    assert jnp.isfinite(loss), "case 1: loss is not finite"
    assert jnp.abs(loss - ref) < 1e-4 * (1.0 + jnp.abs(ref)), (loss, ref)

    # Case 2: exercises K tiling, online logsumexp and last-tile K masking on
    # the exact f32 MXU path (tight tolerance checks the streaming LSE logic).
    B2, D2, K2 = 16, 128, 640
    kq2, kp2, kn2 = jax.random.split(jax.random.PRNGKey(1), 3)
    q2 = jax.random.normal(kq2, (B2, D2), dtype=jnp.float32)
    pos2 = jax.random.normal(kp2, (B2, D2), dtype=jnp.float32)
    neg2 = jax.random.normal(kn2, (K2, D2), dtype=jnp.float32)
    loss2 = jax.block_until_ready(
        nce_loss(q2, pos2, neg2, matmul_dtype=jnp.float32))
    ref2 = jax.block_until_ready(nce_loss_ref(q2, pos2, neg2))
    assert jnp.isfinite(loss2), "case 2: loss is not finite"
    assert jnp.abs(loss2 - ref2) < 1e-3 * (1.0 + jnp.abs(ref2)), (loss2, ref2)

    # Case 3: same data, default settings (bf16 MXU operands for f32 inputs).
    # Tolerance is keyed to the logit scale (bf16 relative error ~1e-3).
    loss3 = jax.block_until_ready(nce_loss(q2, pos2, neg2))
    logit_scale2 = float(jnp.sqrt(jnp.float32(D2))) / TEMPERATURE
    assert jnp.isfinite(loss3), "case 3: loss is not finite"
    assert jnp.abs(loss3 - ref2) < 3e-2 * logit_scale2, (loss3, ref2)

    # Case 4: bf16 inputs, ragged B (row masking) + a single padded K tile.
    B4, D4, K4 = 13, 256, 200
    kq4, kp4, kn4 = jax.random.split(jax.random.PRNGKey(2), 3)
    q4 = jax.random.normal(kq4, (B4, D4), dtype=jnp.bfloat16)
    pos4 = jax.random.normal(kp4, (B4, D4), dtype=jnp.bfloat16)
    neg4 = jax.random.normal(kn4, (K4, D4), dtype=jnp.bfloat16)
    loss4 = jax.block_until_ready(nce_loss(q4, pos4, neg4))
    ref4 = jax.block_until_ready(nce_loss_ref(q4, pos4, neg4))
    logit_scale4 = float(jnp.sqrt(jnp.float32(D4))) / TEMPERATURE
    assert jnp.isfinite(loss4), "case 4: loss is not finite"
    assert jnp.abs(loss4 - ref4) < 3e-2 * logit_scale4, (loss4, ref4)

    print("KERNEL_OK")
</pallas_src>

<mosaic_0001>
module attributes {stable_mosaic.version = 11 : i64} {
  func.func @_nce_kernel(%arg0: i32, %arg1: i32, %arg2: memref<8x32xf32, #tpu.memory_space<vmem>>, %arg3: memref<8x32xf32, #tpu.memory_space<vmem>>, %arg4: memref<128x32xf32, #tpu.memory_space<vmem>>, %arg5: memref<1x8x128xf32, #tpu.memory_space<vmem>>, %arg6: memref<8x32xf32, #tpu.memory_space<vmem>>, %arg7: memref<8x1xf32, #tpu.memory_space<vmem>>, %arg8: memref<8x1xf32, #tpu.memory_space<vmem>>, %arg9: memref<8x1xf32, #tpu.memory_space<vmem>>) attributes {dimension_semantics = [#tpu.dimension_semantics<parallel>, #tpu.dimension_semantics<arbitrary>], iteration_bounds = array<i64: 1, 1>, scalar_prefetch = 0 : i64, scratch_operands = 4 : i64, tpu.core_type = #tpu.core_type<tc>, window_params = [{transform_indices = @transform_0, window_bounds = array<i64: 8, 32>}, {transform_indices = @transform_1, window_bounds = array<i64: 8, 32>}, {transform_indices = @transform_2, window_bounds = array<i64: 128, 32>}, {transform_indices = @transform_3, window_bounds = array<i64: 1, 8, 128>}]} {
    %c0_i32 = arith.constant 0 : i32
    %0 = arith.cmpi eq, %arg1, %c0_i32 : i32
    %1 = arith.extui %0 : i1 to i32
    %cst = arith.constant 1.000000e+01 : f32
    %c0_i32_0 = arith.constant 0 : i32
    %2 = arith.cmpi ne, %1, %c0_i32_0 : i32
    scf.if %2 {
      %c0_11 = arith.constant 0 : index
      %c0_12 = arith.constant 0 : index
      %15 = vector.load %arg2[%c0_11, %c0_12] : memref<8x32xf32, #tpu.memory_space<vmem>>, vector<8x32xf32>
      %16 = vector.broadcast %cst : f32 to vector<8x32xf32>
      %17 = arith.mulf %15, %16 : vector<8x32xf32>
      %c0_13 = arith.constant 0 : index
      %c0_14 = arith.constant 0 : index
      %18 = vector.load %arg6[%c0_13, %c0_14] : memref<8x32xf32, #tpu.memory_space<vmem>>, vector<8x32xf32>
      tpu.vector_store %arg6[%c0_13, %c0_14], %17 {strides = array<i32>} : memref<8x32xf32, #tpu.memory_space<vmem>>, vector<8x32xf32>,
      %c0_15 = arith.constant 0 : index
      %c0_16 = arith.constant 0 : index
      %19 = vector.load %arg3[%c0_15, %c0_16] : memref<8x32xf32, #tpu.memory_space<vmem>>, vector<8x32xf32>
      %20 = arith.mulf %17, %19 : vector<8x32xf32>
      %cst_17 = arith.constant dense<0.000000e+00> : vector<8xf32>
      %21 = vector.multi_reduction <add>, %20, %cst_17 [1] : vector<8x32xf32> to vector<8xf32>
      %22 = vector.shape_cast %21 : vector<8xf32> to vector<8x1xf32>
      %c0_18 = arith.constant 0 : index
      %c0_19 = arith.constant 0 : index
      %23 = vector.load %arg7[%c0_18, %c0_19] : memref<8x1xf32, #tpu.memory_space<vmem>>, vector<8x1xf32>
      tpu.vector_store %arg7[%c0_18, %c0_19], %22 {strides = array<i32>} : memref<8x1xf32, #tpu.memory_space<vmem>>, vector<8x1xf32>,
      %c0_20 = arith.constant 0 : index
      %c0_21 = arith.constant 0 : index
      %24 = vector.load %arg8[%c0_20, %c0_21] : memref<8x1xf32, #tpu.memory_space<vmem>>, vector<8x1xf32>
      tpu.vector_store %arg8[%c0_20, %c0_21], %22 {strides = array<i32>} : memref<8x1xf32, #tpu.memory_space<vmem>>, vector<8x1xf32>,
      %cst_22 = arith.constant 1.000000e+00 : f32
      %25 = vector.broadcast %cst_22 : f32 to vector<8x1xf32>
      %c0_23 = arith.constant 0 : index
      %c0_24 = arith.constant 0 : index
      %26 = vector.load %arg9[%c0_23, %c0_24] : memref<8x1xf32, #tpu.memory_space<vmem>>, vector<8x1xf32>
      tpu.vector_store %arg9[%c0_23, %c0_24], %25 {strides = array<i32>} : memref<8x1xf32, #tpu.memory_space<vmem>>, vector<8x1xf32>,
    } else {
    }
    %c0 = arith.constant 0 : index
    %c0_1 = arith.constant 0 : index
    %3 = vector.load %arg6[%c0, %c0_1] : memref<8x32xf32, #tpu.memory_space<vmem>>, vector<8x32xf32>
    %c0_2 = arith.constant 0 : index
    %c0_3 = arith.constant 0 : index
    %4 = vector.load %arg4[%c0_2, %c0_3] : memref<128x32xf32, #tpu.memory_space<vmem>>, vector<128x32xf32>
    %cst_4 = arith.constant dense<0.000000e+00> : vector<8x128xf32>
    %5 = tpu.matmul %3, %4, %cst_4 {dimension_numbers = #tpu.dot_dimension_numbers<[1], [1], [0], [0], [0, 0, 1, 0], [], []>} : vector<8x32xf32>, vector<128x32xf32>, vector<8x128xf32> -> vector<8x128xf32>
    %c0_i32_5 = arith.constant 0 : i32
    %6 = arith.cmpi slt, %arg1, %c0_i32_5 : i32
    %7 = arith.extui %6 : i1 to i32
    %c0_i32_6 = arith.constant 0 : i32
    %8 = arith.cmpi ne, %7, %c0_i32_6 : i32
    scf.if %8 {
      %c0_11 = arith.constant 0 : index
      %c0_12 = arith.constant 0 : index
      %15 = vector.load %arg8[%c0_11, %c0_12] : memref<8x1xf32, #tpu.memory_space<vmem>>, vector<8x1xf32>
      %cst_13 = arith.constant dense<0xFF800000> : vector<8xf32>
      %16 = vector.multi_reduction <maximumf>, %5, %cst_13 [1] : vector<8x128xf32> to vector<8xf32>
      %17 = vector.shape_cast %16 : vector<8xf32> to vector<8x1xf32>
      %18 = arith.maximumf %15, %17 : vector<8x1xf32>
      %19 = arith.subf %15, %18 : vector<8x1xf32>
      %20 = math.exp %19 : vector<8x1xf32>
      %c0_14 = arith.constant 0 : index
      %c0_15 = arith.constant 0 : index
      %21 = vector.load %arg9[%c0_14, %c0_15] : memref<8x1xf32, #tpu.memory_space<vmem>>, vector<8x1xf32>
      %22 = arith.mulf %20, %21 : vector<8x1xf32>
      %23 = vector.broadcast %18 : vector<8x1xf32> to vector<8x128xf32>
      %24 = arith.subf %5, %23 : vector<8x128xf32>
      %25 = math.exp %24 : vector<8x128xf32>
      %cst_16 = arith.constant dense<0.000000e+00> : vector<8xf32>
      %26 = vector.multi_reduction <add>, %25, %cst_16 [1] : vector<8x128xf32> to vector<8xf32>
      %27 = vector.shape_cast %26 : vector<8xf32> to vector<8x1xf32>
      %28 = arith.addf %22, %27 : vector<8x1xf32>
      %c0_17 = arith.constant 0 : index
      %c0_18 = arith.constant 0 : index
      %29 = vector.load %arg9[%c0_17, %c0_18] : memref<8x1xf32, #tpu.memory_space<vmem>>, vector<8x1xf32>
      tpu.vector_store %arg9[%c0_17, %c0_18], %28 {strides = array<i32>} : memref<8x1xf32, #tpu.memory_space<vmem>>, vector<8x1xf32>,
      %c0_19 = arith.constant 0 : index
      %c0_20 = arith.constant 0 : index
      %30 = vector.load %arg8[%c0_19, %c0_20] : memref<8x1xf32, #tpu.memory_space<vmem>>, vector<8x1xf32>
      tpu.vector_store %arg8[%c0_19, %c0_20], %18 {strides = array<i32>} : memref<8x1xf32, #tpu.memory_space<vmem>>, vector<8x1xf32>,
    } else {
    }
    %c0_i32_7 = arith.constant 0 : i32
    %9 = arith.cmpi eq, %arg1, %c0_i32_7 : i32
    %10 = arith.extui %9 : i1 to i32
    %c0_i32_8 = arith.constant 0 : i32
    %11 = arith.cmpi ne, %10, %c0_i32_8 : i32
    scf.if %11 {
      %15 = tpu.iota {dimensions = array<i32: 1>} : vector<8x128xi32>
      %c128_i32 = arith.constant 128 : i32
      %16 = arith.muli %arg1, %c128_i32 : i32
      %17 = vector.broadcast %16 : i32 to vector<8x128xi32>
      %18 = arith.addi %15, %17 : vector<8x128xi32>
      %c16_i32 = arith.constant 16 : i32
      %19 = vector.broadcast %c16_i32 : i32 to vector<8x128xi32>
      %20 = arith.cmpi slt, %18, %19 : vector<8x128xi32>
      %cst_11 = arith.constant 0xFF800000 : f32
      %21 = vector.broadcast %cst_11 : f32 to vector<8x128xf32>
      %22 = arith.select %20, %5, %21 : vector<8x128xi1>, vector<8x128xf32>
      %c0_12 = arith.constant 0 : index
      %c0_13 = arith.constant 0 : index
      %23 = vector.load %arg8[%c0_12, %c0_13] : memref<8x1xf32, #tpu.memory_space<vmem>>, vector<8x1xf32>
      %cst_14 = arith.constant dense<0xFF800000> : vector<8xf32>
      %24 = vector.multi_reduction <maximumf>, %22, %cst_14 [1] : vector<8x128xf32> to vector<8xf32>
      %25 = vector.shape_cast %24 : vector<8xf32> to vector<8x1xf32>
      %26 = arith.maximumf %23, %25 : vector<8x1xf32>
      %27 = arith.subf %23, %26 : vector<8x1xf32>
      %28 = math.exp %27 : vector<8x1xf32>
      %c0_15 = arith.constant 0 : index
      %c0_16 = arith.constant 0 : index
      %29 = vector.load %arg9[%c0_15, %c0_16] : memref<8x1xf32, #tpu.memory_space<vmem>>, vector<8x1xf32>
      %30 = arith.mulf %28, %29 : vector<8x1xf32>
      %31 = vector.broadcast %26 : vector<8x1xf32> to vector<8x128xf32>
      %32 = arith.subf %22, %31 : vector<8x128xf32>
      %33 = math.exp %32 : vector<8x128xf32>
      %cst_17 = arith.constant dense<0.000000e+00> : vector<8xf32>
      %34 = vector.multi_reduction <add>, %33, %cst_17 [1] : vector<8x128xf32> to vector<8xf32>
      %35 = vector.shape_cast %34 : vector<8xf32> to vector<8x1xf32>
      %36 = arith.addf %30, %35 : vector<8x1xf32>
      %c0_18 = arith.constant 0 : index
      %c0_19 = arith.constant 0 : index
      %37 = vector.load %arg9[%c0_18, %c0_19] : memref<8x1xf32, #tpu.memory_space<vmem>>, vector<8x1xf32>
      tpu.vector_store %arg9[%c0_18, %c0_19], %36 {strides = array<i32>} : memref<8x1xf32, #tpu.memory_space<vmem>>, vector<8x1xf32>,
      %c0_20 = arith.constant 0 : index
      %c0_21 = arith.constant 0 : index
      %38 = vector.load %arg8[%c0_20, %c0_21] : memref<8x1xf32, #tpu.memory_space<vmem>>, vector<8x1xf32>
      tpu.vector_store %arg8[%c0_20, %c0_21], %26 {strides = array<i32>} : memref<8x1xf32, #tpu.memory_space<vmem>>, vector<8x1xf32>,
    } else {
    }
    %c0_i32_9 = arith.constant 0 : i32
    %12 = arith.cmpi eq, %arg1, %c0_i32_9 : i32
    %13 = arith.extui %12 : i1 to i32
    %c0_i32_10 = arith.constant 0 : i32
    %14 = arith.cmpi ne, %13, %c0_i32_10 : i32
    scf.if %14 {
      %c0_11 = arith.constant 0 : index
      %c0_12 = arith.constant 0 : index
      %15 = vector.load %arg8[%c0_11, %c0_12] : memref<8x1xf32, #tpu.memory_space<vmem>>, vector<8x1xf32>
      %c0_13 = arith.constant 0 : index
      %c0_14 = arith.constant 0 : index
      %16 = vector.load %arg9[%c0_13, %c0_14] : memref<8x1xf32, #tpu.memory_space<vmem>>, vector<8x1xf32>
      %17 = math.log %16 : vector<8x1xf32>
      %18 = arith.addf %15, %17 : vector<8x1xf32>
      %c0_15 = arith.constant 0 : index
      %c0_16 = arith.constant 0 : index
      %19 = vector.load %arg7[%c0_15, %c0_16] : memref<8x1xf32, #tpu.memory_space<vmem>>, vector<8x1xf32>
      %20 = arith.subf %18, %19 : vector<8x1xf32>
      %cst_17 = arith.constant dense<0.000000e+00> : vector<1xf32>
      %21 = vector.multi_reduction <add>, %20, %cst_17 [0] : vector<8x1xf32> to vector<1xf32>
      %22 = vector.shape_cast %21 : vector<1xf32> to vector<1x1xf32>
      %23 = vector.shape_cast %22 : vector<1x1xf32> to vector<1x1xf32>
      %24 = vector.broadcast %23 : vector<1x1xf32> to vector<8x128xf32>
      %c0_18 = arith.constant 0 : index
      %c0_19 = arith.constant 0 : index
      %c0_20 = arith.constant 0 : index
      %25 = vector.load %arg5[%c0_18, %c0_19, %c0_20] : memref<1x8x128xf32, #tpu.memory_space<vmem>>, vector<1x8x128xf32>
      %26 = vector.shape_cast %25 : vector<1x8x128xf32> to vector<8x128xf32>
      %27 = vector.shape_cast %24 : vector<8x128xf32> to vector<1x8x128xf32>
      tpu.vector_store %arg5[%c0_18, %c0_19, %c0_20], %27 {strides = array<i32>} : memref<1x8x128xf32, #tpu.memory_space<vmem>>, vector<1x8x128xf32>,
    } else {
    }
    return
  }
  func.func @transform_0(%arg0: i32, %arg1: i32) -> (i32, i32) {
    %c0_i32 = arith.constant 0 : i32
    %c0_i32_0 = arith.constant 0 : i32
    return %arg0, %c0_i32 : i32, i32
  }
  func.func @transform_1(%arg0: i32, %arg1: i32) -> (i32, i32) {
    %c0_i32 = arith.constant 0 : i32
    %c0_i32_0 = arith.constant 0 : i32
    return %arg0, %c0_i32 : i32, i32
  }
  func.func @transform_2(%arg0: i32, %arg1: i32) -> (i32, i32) {
    %c0_i32 = arith.constant 0 : i32
    %c0_i32_0 = arith.constant 0 : i32
    return %arg1, %c0_i32 : i32, i32
  }
  func.func @transform_3(%arg0: i32, %arg1: i32) -> (i32, i32, i32) {
    %c0_i32 = arith.constant 0 : i32
    %c0_i32_0 = arith.constant 0 : i32
    %c0_i32_1 = arith.constant 0 : i32
    return %arg0, %c0_i32, %c0_i32_0 : i32, i32, i32
  }
}

</mosaic_0001>

<llo_original>
// kernel: tpu_custom_call.1
$region0: #{tpu_custom_call.1}
  #allocation0 [shape = 'u32[]', space=smem, size = 0x4, offset = 0x4, fixed_abs, tag = 'smem constant byte address 0x4 - core index']
  #allocation1 [shape = 'u32[72,128]{1,0:T(1,128)}', space=vmem, size = 0x9000, scoped, tag = 'internal scratch']
  #allocation2 [shape = 'f32[8,32]{1,0:T(8,128)}', space=vmem, size = 0x1000, scoped, tag = 'scratch operand']
  #allocation3 [shape = 'f32[8,1]{1,0:T(8,128)}', space=vmem, size = 0x1000, scoped, tag = 'scratch operand']
  #allocation4 [shape = 'f32[8,1]{1,0:T(8,128)}', space=vmem, size = 0x1000, scoped, tag = 'scratch operand']
  #allocation5 [shape = 'f32[8,1]{1,0:T(8,128)}', space=vmem, size = 0x1000, scoped, tag = 'scratch operand']
  %s0 = inlined_call_operand.vmem [shape: f32[8,32], index: 0, kind: input, shape index: {}]
  %s1 = inlined_call_operand.vmem [shape: f32[8,32], index: 1, kind: input, shape index: {}]
  %s2 = inlined_call_operand.vmem [shape: f32[128,32], index: 2, kind: input, shape index: {}]
  %s3 = inlined_call_operand.hbm [shape: f32[1,8,128], index: 3, kind: output, shape index: {}]
  %s4 = sld [smem:[#allocation0]]
  $region34: #{tpu_custom_call.1} parent=0
    _
  %s6 = ssub.s32 1, %s4
  %s7 = scalar_select 0, %s6, %s4
  $region1: #{tpu_custom_call.1} parent=0
    #allocation6 [shape = 'u8[4096]{0}', space=vmem, size = 0x1000, scoped, tag = 'output window, operand 0, single buffered']
    #allocation7 [shape = 's32[1]{0}', space=sflag, size = 0x4, scoped, tag = 'scoped memory for tpu_custom_call.1']
    %8 = vsyncpa [#allocation7], 0
    // Predicated region
    $region2: #{tpu_custom_call.1} parent=1 // pred_check
      _
    $region3: #{tpu_custom_call.1} parent=1 // pred_check_branch
      %10 = sbr.rel (0) target = $region5
    $region4: #{tpu_custom_call.1} parent=1 // pred_region
      _
    $region5: #{tpu_custom_call.1} parent=1 // pred_fallthru
      _
    // Predicated region
    $region6: #{tpu_custom_call.1} parent=1 // pred_check
      _
    $region7: #{tpu_custom_call.1} parent=1 // pred_check_branch
      %12 = sbr.rel (0) target = $region9
    $region8: #{tpu_custom_call.1} parent=1 // pred_region
      _
    $region9: #{tpu_custom_call.1} parent=1 // pred_fallthru
      _
    // Predicated region
    $region10: #{tpu_custom_call.1} parent=1 // pred_check
      _
    $region11: #{tpu_custom_call.1} parent=1 // pred_check_branch
      %14 = sbr.rel (0) target = $region13
    $region12: #{tpu_custom_call.1} parent=1 // pred_region
      _
    $region13: #{tpu_custom_call.1} parent=1 // pred_fallthru
      _
    %p15 = scmp.eq.s32.totalorder 0, 0
    // Predicated region
    $region14: #{tpu_custom_call.1} parent=1 // pred_check
      %p16 = pneg %p15
    $region15: #{tpu_custom_call.1} parent=1 // pred_check_branch
      %18 = sbr.rel (%p16) target = $region17
    $region16: #{tpu_custom_call.1} parent=1 // pred_region
      %v19 = vld [vmem:[%s0] sm:$0xff]
      %v20 = vmul.f32 %v19, 10.0
      %vm21 = vcmask 261120
      %22 = vst.msk [vmem:[#allocation2] sm:$0xff] %vm21, %v20
      %v23 = vld [vmem:[%s1] sm:$0xff]
      %v24 = vmul.f32 %v20, %v23
      %v25 = vsel %vm21, %v24, 0.0
      %26 = vadd.xlane.f32.xlu0 %v25
      %v27 = vpop.xlane.xlu0 %26
      %vm28 = vcmask 7168
      %29 = vst.msk [vmem:[#allocation3] sm:$0xff] %vm28, %v27
      %30 = vst.msk [vmem:[#allocation4] sm:$0xff] %vm28, %v27
      %31 = vst.msk [vmem:[#allocation5] sm:$0xff] %vm28, 1.0
    $region17: #{tpu_custom_call.1} parent=1 // pred_fallthru
      _
    %v32 = vld [vmem:[#allocation2] sm:$0xff]
    %v33 = vld [vmem:[%s2] sm:$0xff]
    %v34 = vld [vmem:[%s2 + $0x8] sm:$0xff]
    %v35 = vld [vmem:[%s2 + $0x10] sm:$0xff]
    %v36 = vld [vmem:[%s2 + $0x18] sm:$0xff]
    %v37 = vld [vmem:[%s2 + $0x20] sm:$0xff]
    %v38 = vld [vmem:[%s2 + $0x28] sm:$0xff]
    %v39 = vld [vmem:[%s2 + $0x30] sm:$0xff]
    %v40 = vld [vmem:[%s2 + $0x38] sm:$0xff]
    %v41 = vld [vmem:[%s2 + $0x40] sm:$0xff]
    %v42 = vld [vmem:[%s2 + $0x48] sm:$0xff]
    %v43 = vld [vmem:[%s2 + $0x50] sm:$0xff]
    %v44 = vld [vmem:[%s2 + $0x58] sm:$0xff]
    %v45 = vld [vmem:[%s2 + $0x60] sm:$0xff]
    %v46 = vld [vmem:[%s2 + $0x68] sm:$0xff]
    %v47 = vld [vmem:[%s2 + $0x70] sm:$0xff]
    %v48 = vld [vmem:[%s2 + $0x78] sm:$0xff]
    %vm49 = vcmask 261120
    %v51 = vsel %vm49, %v32, 0
    %v54 = vsel %vm49, %v33, 0
    %v57 = vsel %vm49, %v34, 0
    %v60 = vsel %vm49, %v35, 0
    %v63 = vsel %vm49, %v36, 0
    %v66 = vsel %vm49, %v37, 0
    %v69 = vsel %vm49, %v38, 0
    %v72 = vsel %vm49, %v39, 0
    %v75 = vsel %vm49, %v40, 0
    %v78 = vsel %vm49, %v41, 0
    %v81 = vsel %vm49, %v42, 0
    %v84 = vsel %vm49, %v43, 0
    %v87 = vsel %vm49, %v44, 0
    %v90 = vsel %vm49, %v45, 0
    %v93 = vsel %vm49, %v46, 0
    %v96 = vsel %vm49, %v47, 0
    %v99 = vsel %vm49, %v48, 0
    %101 = vmatpush.xpose.msra.mxu0 %v99
    %102 = vmatpush.xpose.msra.mxu0 %v96
    %103 = vmatpush.xpose.msra.mxu0 %v93
    %104 = vmatpush.xpose.msra.mxu0 %v90
    %105 = vmatpush.xpose.msra.mxu0 %v87
    %106 = vmatpush.xpose.msra.mxu0 %v84
    %107 = vmatpush.xpose.msra.mxu0 %v81
    %108 = vmatpush.xpose.msra.mxu0 %v78
    %109 = vmatpush.xpose.msra.mxu0 %v75
    %110 = vmatpush.xpose.msra.mxu0 %v72
    %111 = vmatpush.xpose.msra.mxu0 %v69
    %112 = vmatpush.xpose.msra.mxu0 %v66
    %113 = vmatpush.xpose.msra.mxu0 %v63
    %114 = vmatpush.xpose.msra.mxu0 %v60
    %115 = vmatpush.xpose.msra.mxu0 %v57
    %116 = vmatpush.xpose.msra.mxu0 %v54
    %117 = vmatmul.f32.gmra.mxu0 %v51
    %v118 = vpop.f32.mrf.mxu0
    %v119 = vadd.f32 0.0, %v118
    %120 = vdwg.mxu0
    %p121 = scmp.lt.s32.totalorder 0, 0
    // Predicated region
    $region18: #{tpu_custom_call.1} parent=1 // pred_check
      %p122 = pneg %p121
    $region19: #{tpu_custom_call.1} parent=1 // pred_check_branch
      %124 = sbr.rel (%p122) target = $region21
    $region20: #{tpu_custom_call.1} parent=1 // pred_region
      %v125 = vld [vmem:[#allocation4] sm:$0xff]
      %126 = vmax.xlane.f32.xlu0 %v119
      %v127 = vpop.xlane.xlu0 %126
      %v128 = vmax.f32 %v125, %v127
      %v129 = vsub.f32 %v125, %v128
      %v130 = vmul.f32 %v129, 1.442695
      %v131 = vpow.pop %v130
      %v132 = vld [vmem:[#allocation5] sm:$0xff]
      %v133 = vmul.f32 %v131, %v132
      %135 = vset.pattern.permute.xlu0 0
      %136 = vperm.xlu0 %135, %v128
      %v137 = vpop.permute.xlu0 %136
      %v139 = vsub.f32 %v119, %v137
      %v140 = vmul.f32 %v139, 1.442695
      %v141 = vpow.pop %v140
      %142 = vadd.xlane.f32.xlu0 %v141
      %v143 = vpop.xlane.xlu0 %142
      %v144 = vadd.f32 %v133, %v143
      %vm145 = vcmask 7168
      %146 = vst.msk [vmem:[#allocation5] sm:$0xff] %vm145, %v144
      %147 = vst.msk [vmem:[#allocation4] sm:$0xff] %vm145, %v128
    $region21: #{tpu_custom_call.1} parent=1 // pred_fallthru
      _
    // Predicated region
    $region22: #{tpu_custom_call.1} parent=1 // pred_check
      %p148 = pneg %p15
    $region23: #{tpu_custom_call.1} parent=1 // pred_check_branch
      %150 = sbr.rel (%p148) target = $region25
    $region24: #{tpu_custom_call.1} parent=1 // pred_region
      %v151 = vlaneseq
      %v152 = vand.u32 %v151, 127
      %s153 = smul.u32 0, 128
      %v154 = vstv %s153
      %v155 = vadd.s32 %v152, %v154
      %vm156 = vcmp.lt.s32.totalorder %v155, 16
      %v157 = vsel %vm156, %v119, -inf
      %v158 = vld [vmem:[#allocation4] sm:$0xff]
      %159 = vmax.xlane.f32.xlu0 %v157
      %v160 = vpop.xlane.xlu0 %159
      %v161 = vmax.f32 %v158, %v160
      %v162 = vsub.f32 %v158, %v161
      %v163 = vmul.f32 %v162, 1.442695
      %v164 = vpow.pop %v163
      %v165 = vld [vmem:[#allocation5] sm:$0xff]
      %v166 = vmul.f32 %v164, %v165
      %168 = vset.pattern.permute.xlu0 0
      %169 = vperm.xlu0 %168, %v161
      %v170 = vpop.permute.xlu0 %169
      %v172 = vsub.f32 %v157, %v170
      %v173 = vmul.f32 %v172, 1.442695
      %v174 = vpow.pop %v173
      %175 = vadd.xlane.f32.xlu0 %v174
      %v176 = vpop.xlane.xlu0 %175
      %v177 = vadd.f32 %v166, %v176
      %vm178 = vcmask 7168
      %179 = vst.msk [vmem:[#allocation5] sm:$0xff] %vm178, %v177
      %180 = vst.msk [vmem:[#allocation4] sm:$0xff] %vm178, %v161
      %v181 = vld [vmem:[#allocation4] sm:$0xff]
      %v182 = vld [vmem:[#allocation5] sm:$0xff]
      %v183 = vlog2.pop %v182
      %v184 = vmul.f32 %v183, 0.6931472
      %v185 = vadd.f32 %v181, %v184
      %v186 = vld [vmem:[#allocation3] sm:$0xff]
      %v187 = vsub.f32 %v185, %v186
      %v188 = vsel %vm178, %v187, 0.0
      %v189 = vrot.slane %v188, 4
      %v190 = vadd.f32 %v188, %v189
      %v191 = vrot.slane %v190, 2
      %v192 = vadd.f32 %v190, %v191
      %v193 = vrot.slane %v192, 1
      %v194 = vadd.f32 %v192, %v193
      %196 = vset.pattern.permute.xlu0 0
      %197 = vperm.xlu0 %196, %v194
      %v198 = vpop.permute.xlu0 %197
      %200 = vst [vmem:[#allocation6] sm:$0xff] %v198
    $region25: #{tpu_custom_call.1} parent=1 // pred_fallthru
      _
    // Predicated region
    $region26: #{tpu_custom_call.1} parent=1 // pred_check
      _
    $region27: #{tpu_custom_call.1} parent=1 // pred_check_branch
      %202 = sbr.rel (0) target = $region29
    $region28: #{tpu_custom_call.1} parent=1 // pred_region
      %204 = vsyncadd [#allocation7], 0
      %s206 = sshll.u32 [#allocation6], 4
      %s207 = int_to_ptr.vmem [resolvable:$true] %s206
      %s208 = sshll.u32 %s3, 4
      %s209 = int_to_ptr.hbm [resolvable:$true] %s208
      %211 = dma.vmem_to_hbm [thread:$0]  %s207, 128, %s209, [#allocation7]
    $region29: #{tpu_custom_call.1} parent=1 // pred_fallthru
      _
    // Predicated region
    $region30: #{tpu_custom_call.1} parent=1 // pred_check
      _
    $region31: #{tpu_custom_call.1} parent=1 // pred_check_branch
      %213 = sbr.rel (0) target = $region33
    $region32: #{tpu_custom_call.1} parent=1 // pred_region
      %215 = dma.done [#allocation7], 128
    $region33: #{tpu_custom_call.1} parent=1 // pred_fallthru
      _
    %216 = vsyncpa [#allocation7], 1

</llo_original>
